<compile_context>
chip_gen: v7x
topology: tpu7x:2x2x1
jax: 0.10.0
libtpu: 0.0.40
codegen_flags: <defaults>
</compile_context>

<pallas_src>
import math
import jax
import jax.numpy as jnp
from jax.experimental import pallas as pl
from jax.experimental.pallas import tpu as pltpu


def _round_up(x, m):
    return ((x + m - 1) // m) * m


def _divisor_chunk(n, target):
    """Largest divisor of n that is <= target (avoids padding the time axis)."""
    c = min(n, target)
    while n % c:
        c -= 1
    return c


def lstm_chunk_kernel(gx_ref, whh_ref, h_ref, c_scr):
    """One time-chunk of the LSTM recurrence.

    gx_ref : (Tc, Bb, G) f32  time-major pre-projected gate inputs (x @ W_ih^T + b)
    whh_ref: (H, G)  bf16     recurrent weight (transposed, gate-packed)
    h_ref  : (Bb, H) f32      hidden state; resident output block (carried over t)
    c_scr  : (Bb, H) f32      cell state; VMEM scratch (carried over t)
    """
    H = whh_ref.shape[0]
    Tc, Bb, G = gx_ref.shape

    @pl.when(pl.program_id(1) == 0)       # first chunk of this batch block
    def _():
        h_ref[...] = jnp.zeros_like(h_ref)
        c_scr[...] = jnp.zeros_like(c_scr)

    whh = whh_ref[...]                    # hoisted: loop-invariant MXU RHS
    lane = jax.lax.broadcasted_iota(jnp.int32, (Bb, G), 1)
    is_g = (lane >= 2 * H) & (lane < 3 * H)   # "g" gate lanes use tanh

    def step(t, carry):
        h, c = carry
        gates = gx_ref[t] + jnp.dot(h.astype(whh.dtype), whh,
                                    preferred_element_type=jnp.float32)
        # One EUP pass for all 4 gates: sigmoid(x) = 0.5 * (1 + tanh(x / 2)).
        th = jnp.tanh(jnp.where(is_g, gates, 0.5 * gates))
        act = jnp.where(is_g, th, 0.5 * (th + 1.0))
        i_g = act[:, 0 * H:1 * H]
        f_g = act[:, 1 * H:2 * H]
        g_g = act[:, 2 * H:3 * H]
        o_g = act[:, 3 * H:4 * H]
        c_new = f_g * c + i_g * g_g
        h_new = o_g * jnp.tanh(c_new)
        return h_new, c_new

    # Bounded unroll: the loop only spans one chunk (<= t_chunk steps).
    h_fin, c_fin = jax.lax.fori_loop(0, Tc, step, (h_ref[...], c_scr[...]),
                                     unroll=True)
    h_ref[...] = h_fin
    c_scr[...] = c_fin


def rnn_lstm_forward(x, params, *, t_chunk=8):
    """x: (B, C, H, W, T) float32 -> (B, num_classes).  Same semantics as the
    PyTorch module: flatten dims 1..3, permute to (B, T, D), LSTM, Linear(h_T)."""
    wih_bf, whh_bf, b_pad, w_lin, b_lin = params
    B = x.shape[0]
    T = x.shape[-1]
    D = x.shape[1] * x.shape[2] * x.shape[3]
    G = wih_bf.shape[1]                   # 4*H padded jointly to a lane multiple
    Hs = whh_bf.shape[0]                  # lstm_size (unpadded)
    Bp = _round_up(max(B, 8), 8)

    # Hoisted, non-recurrent input projection: one big bf16 MXU matmul in (B, T)
    # order; only the (small) gx result is permuted to time-major, not x.
    x_bdt = x.reshape(B, D, T)
    gx = jnp.einsum('bdt,dg->btg', x_bdt.astype(jnp.bfloat16), wih_bf,
                    preferred_element_type=jnp.float32)
    gx = gx + b_pad[None, None, :]
    gx = jnp.transpose(gx, (1, 0, 2))                      # (T, B, G)
    if Bp != B:  # pad batch to a sublane multiple (padded rows stay exactly 0)
        gx = jnp.pad(gx, ((0, 0), (0, Bp - B), (0, 0)))

    # Grid: (batch blocks [parallel], time chunks [arbitrary / carried]).
    nb = 2 if (Bp >= 16 and Bp % 16 == 0) else 1           # v7x: use both TCs
    bb = Bp // nb
    tc = _divisor_chunk(T, t_chunk)
    nt = T // tc

    # Explicit scoped-VMEM budget: double-buffered gx chunk + weights + h/c.
    gx_block = tc * bb * G * 4
    whh_block = Hs * G * 2
    hc_block = bb * Hs * 4
    vmem_limit = int(max(2 * (gx_block + whh_block + hc_block) + hc_block
                         + (4 << 20), 16 << 20))

    h_t = pl.pallas_call(
        lstm_chunk_kernel,
        out_shape=jax.ShapeDtypeStruct((Bp, Hs), jnp.float32),
        grid_spec=pltpu.PrefetchScalarGridSpec(
            num_scalar_prefetch=0,
            grid=(nb, nt),
            in_specs=[
                pl.BlockSpec((tc, bb, G), lambda b, t: (t, b, 0)),   # gx chunk
                pl.BlockSpec((Hs, G), lambda b, t: (0, 0)),          # W_hh^T
            ],
            out_specs=pl.BlockSpec((bb, Hs), lambda b, t: (b, 0)),   # h carry
            scratch_shapes=[pltpu.VMEM((bb, Hs), jnp.float32)],      # c carry
        ),
        compiler_params=pltpu.CompilerParams(
            dimension_semantics=("parallel", "arbitrary"),
            vmem_limit_bytes=vmem_limit),
    )(gx, whh_bf)

    # Final Linear on h_T in plain XLA (num_classes=5 is lane-sparse; keeping it
    # out of the kernel keeps the kernel output a clean dense block).
    return h_t[:B] @ w_lin.T + b_lin


def prepare_params(raw, lane=128):
    """Kernel-friendly layouts: pack the 4 gates tightly; pad 4*H jointly to a
    lane multiple G (no per-gate padding -> gx and W_hh stay 4x/16x smaller).
    Gate order (i, f, g, o) is preserved; zero padding is exact."""
    w_ih, w_hh, b_ih, b_hh, w_lin, b_lin = raw
    H = w_hh.shape[1]
    G = _round_up(4 * H, lane)
    pad_g = G - 4 * H

    wih_t = jnp.pad(w_ih.T, ((0, 0), (0, pad_g)))          # (D, G)
    whh_t = jnp.pad(w_hh.T, ((0, 0), (0, pad_g)))          # (H, G)
    b = jnp.pad(b_ih + b_hh, ((0, pad_g),))                # (G,)
    return (wih_t.astype(jnp.bfloat16), whh_t.astype(jnp.bfloat16),
            b.astype(jnp.float32), w_lin, b_lin)


def init_params(key, input_size, lstm_size, num_classes):
    """Deterministic init mimicking PyTorch's U(-1/sqrt(H), 1/sqrt(H))."""
    k = 1.0 / math.sqrt(lstm_size)
    keys = jax.random.split(key, 6)
    w_ih = jax.random.uniform(keys[0], (4 * lstm_size, input_size), jnp.float32, -k, k)
    w_hh = jax.random.uniform(keys[1], (4 * lstm_size, lstm_size), jnp.float32, -k, k)
    b_ih = jax.random.uniform(keys[2], (4 * lstm_size,), jnp.float32, -k, k)
    b_hh = jax.random.uniform(keys[3], (4 * lstm_size,), jnp.float32, -k, k)
    w_lin = jax.random.uniform(keys[4], (num_classes, lstm_size), jnp.float32, -k, k)
    b_lin = jax.random.uniform(keys[5], (num_classes,), jnp.float32, -k, k)
    raw = (w_ih, w_hh, b_ih, b_hh, w_lin, b_lin)
    return prepare_params(raw), raw


def reference_forward(x, raw_params):
    """Pure-JAX f32 reference of the PyTorch forward pass (for verification)."""
    w_ih, w_hh, b_ih, b_hh, w_lin, b_lin = raw_params
    B = x.shape[0]
    D = x.shape[1] * x.shape[2] * x.shape[3]
    T = x.shape[-1]
    Hs = w_hh.shape[1]
    x_btd = jnp.transpose(x.reshape(B, D, T), (0, 2, 1))

    def step(carry, x_t):
        h, c = carry
        gates = x_t @ w_ih.T + b_ih + h @ w_hh.T + b_hh
        i = jax.nn.sigmoid(gates[:, 0 * Hs:1 * Hs])
        f = jax.nn.sigmoid(gates[:, 1 * Hs:2 * Hs])
        g = jnp.tanh(gates[:, 2 * Hs:3 * Hs])
        o = jax.nn.sigmoid(gates[:, 3 * Hs:4 * Hs])
        c = f * c + i * g
        h = o * jnp.tanh(c)
        return (h, c), None

    h0 = jnp.zeros((B, Hs), jnp.float32)
    (hT, _), _ = jax.lax.scan(step, (h0, h0), jnp.transpose(x_btd, (1, 0, 2)))
    return hT @ w_lin.T + b_lin


if __name__ == "__main__":
    # x is (B, C, H, W, T); input_size = C*H*W, seq_len = T.
    # T=16 with the default t_chunk=8 exercises the multi-chunk carry path.
    B, C, H, W, T = 2, 2, 2, 4, 16         # input_size = 16
    lstm_size = 32
    num_classes = 5

    key = jax.random.PRNGKey(0)
    kx, kp = jax.random.split(key)
    x = jax.random.normal(kx, (B, C, H, W, T), dtype=jnp.float32)

    params, raw_params = init_params(kp, C * H * W, lstm_size, num_classes)

    fwd = jax.jit(rnn_lstm_forward)
    out = jax.block_until_ready(fwd(x, params))

    ref = reference_forward(x, raw_params)
    assert out.shape == (B, num_classes)
    # bf16 MXU inputs (f32 accumulate) => tolerance loosened vs the pure-f32 path.
    assert jnp.allclose(out, ref, atol=2e-2, rtol=2e-2), (out, ref)

    print("KERNEL_OK")
</pallas_src>

<mosaic_0001>
module attributes {stable_mosaic.version = 11 : i64} {
  func.func @lstm_chunk_kernel(%arg0: i32, %arg1: i32, %arg2: memref<8x8x128xf32, #tpu.memory_space<vmem>>, %arg3: memref<32x128xbf16, #tpu.memory_space<vmem>>, %arg4: memref<8x32xf32, #tpu.memory_space<vmem>>, %arg5: memref<8x32xf32, #tpu.memory_space<vmem>>) attributes {dimension_semantics = [#tpu.dimension_semantics<parallel>, #tpu.dimension_semantics<arbitrary>], iteration_bounds = array<i64: 1, 2>, scalar_prefetch = 0 : i64, scratch_operands = 1 : i64, tpu.core_type = #tpu.core_type<tc>, window_params = [{transform_indices = @transform_0, window_bounds = array<i64: 8, 8, 128>}, {pipeline_mode = #tpu.pipeline_mode<synchronous>, transform_indices = @transform_1, window_bounds = array<i64: 32, 128>}, {transform_indices = @transform_2, window_bounds = array<i64: 8, 32>}]} {
    %c0_i32 = arith.constant 0 : i32
    %0 = arith.cmpi eq, %arg1, %c0_i32 : i32
    %1 = arith.extui %0 : i1 to i32
    %c0_i32_0 = arith.constant 0 : i32
    %2 = arith.cmpi ne, %1, %c0_i32_0 : i32
    scf.if %2 {
      %cst_58 = arith.constant 0.000000e+00 : f32
      %206 = vector.broadcast %cst_58 : f32 to vector<8x32xf32>
      %c0_59 = arith.constant 0 : index
      %c0_60 = arith.constant 0 : index
      %207 = vector.load %arg4[%c0_59, %c0_60] : memref<8x32xf32, #tpu.memory_space<vmem>>, vector<8x32xf32>
      tpu.vector_store %arg4[%c0_59, %c0_60], %206 {strides = array<i32>} : memref<8x32xf32, #tpu.memory_space<vmem>>, vector<8x32xf32>,
      %cst_61 = arith.constant 0.000000e+00 : f32
      %208 = vector.broadcast %cst_61 : f32 to vector<8x32xf32>
      %c0_62 = arith.constant 0 : index
      %c0_63 = arith.constant 0 : index
      %209 = vector.load %arg5[%c0_62, %c0_63] : memref<8x32xf32, #tpu.memory_space<vmem>>, vector<8x32xf32>
      tpu.vector_store %arg5[%c0_62, %c0_63], %208 {strides = array<i32>} : memref<8x32xf32, #tpu.memory_space<vmem>>, vector<8x32xf32>,
    } else {
    }
    %c0 = arith.constant 0 : index
    %c0_1 = arith.constant 0 : index
    %3 = vector.load %arg3[%c0, %c0_1] : memref<32x128xbf16, #tpu.memory_space<vmem>>, vector<32x128xbf16>
    %4 = tpu.iota {dimensions = array<i32: 1>} : vector<8x128xi32>
    %c64_i32 = arith.constant 64 : i32
    %5 = vector.broadcast %c64_i32 : i32 to vector<8x128xi32>
    %6 = arith.cmpi sge, %4, %5 : vector<8x128xi32>
    %c96_i32 = arith.constant 96 : i32
    %7 = vector.broadcast %c96_i32 : i32 to vector<8x128xi32>
    %8 = arith.cmpi slt, %4, %7 : vector<8x128xi32>
    %9 = arith.andi %6, %8 : vector<8x128xi1>
    %c0_2 = arith.constant 0 : index
    %c0_3 = arith.constant 0 : index
    %10 = vector.load %arg4[%c0_2, %c0_3] : memref<8x32xf32, #tpu.memory_space<vmem>>, vector<8x32xf32>
    %c0_4 = arith.constant 0 : index
    %c0_5 = arith.constant 0 : index
    %11 = vector.load %arg5[%c0_4, %c0_5] : memref<8x32xf32, #tpu.memory_space<vmem>>, vector<8x32xf32>
    %c0_i32_6 = arith.constant 0 : i32
    %12 = arith.index_cast %c0_i32_6 : i32 to index
    %c0_7 = arith.constant 0 : index
    %c0_8 = arith.constant 0 : index
    %13 = vector.load %arg2[%12, %c0_7, %c0_8] : memref<8x8x128xf32, #tpu.memory_space<vmem>>, vector<1x8x128xf32>
    %14 = vector.shape_cast %13 : vector<1x8x128xf32> to vector<8x128xf32>
    %15 = arith.truncf %10 : vector<8x32xf32> to vector<8x32xbf16>
    %cst = arith.constant dense<0.000000e+00> : vector<8x128xf32>
    %16 = tpu.matmul %15, %3, %cst {dimension_numbers = #tpu.dot_dimension_numbers<[1], [0], [0], [1], [0, 0, 1, 1], [], []>} : vector<8x32xbf16>, vector<32x128xbf16>, vector<8x128xf32> -> vector<8x128xf32>
    %17 = arith.addf %14, %16 : vector<8x128xf32>
    %cst_9 = arith.constant 5.000000e-01 : f32
    %18 = vector.broadcast %cst_9 : f32 to vector<8x128xf32>
    %19 = arith.mulf %18, %17 : vector<8x128xf32>
    %20 = arith.select %9, %17, %19 : vector<8x128xi1>, vector<8x128xf32>
    %21 = math.tanh %20 : vector<8x128xf32>
    %cst_10 = arith.constant 1.000000e+00 : f32
    %22 = vector.broadcast %cst_10 : f32 to vector<8x128xf32>
    %23 = arith.addf %21, %22 : vector<8x128xf32>
    %cst_11 = arith.constant 5.000000e-01 : f32
    %24 = vector.broadcast %cst_11 : f32 to vector<8x128xf32>
    %25 = arith.mulf %24, %23 : vector<8x128xf32>
    %26 = arith.select %9, %21, %25 : vector<8x128xi1>, vector<8x128xf32>
    %27 = vector.extract_strided_slice %26 {offsets = [0, 0], sizes = [8, 32], strides = [1, 1]} : vector<8x128xf32> to vector<8x32xf32>
    %28 = vector.extract_strided_slice %26 {offsets = [0, 32], sizes = [8, 32], strides = [1, 1]} : vector<8x128xf32> to vector<8x32xf32>
    %29 = vector.extract_strided_slice %26 {offsets = [0, 64], sizes = [8, 32], strides = [1, 1]} : vector<8x128xf32> to vector<8x32xf32>
    %30 = vector.extract_strided_slice %26 {offsets = [0, 96], sizes = [8, 32], strides = [1, 1]} : vector<8x128xf32> to vector<8x32xf32>
    %31 = arith.mulf %28, %11 : vector<8x32xf32>
    %32 = arith.mulf %27, %29 : vector<8x32xf32>
    %33 = arith.addf %31, %32 : vector<8x32xf32>
    %34 = math.tanh %33 : vector<8x32xf32>
    %35 = arith.mulf %30, %34 : vector<8x32xf32>
    %c1_i32 = arith.constant 1 : i32
    %36 = arith.index_cast %c1_i32 : i32 to index
    %c0_12 = arith.constant 0 : index
    %c0_13 = arith.constant 0 : index
    %37 = vector.load %arg2[%36, %c0_12, %c0_13] : memref<8x8x128xf32, #tpu.memory_space<vmem>>, vector<1x8x128xf32>
    %38 = vector.shape_cast %37 : vector<1x8x128xf32> to vector<8x128xf32>
    %39 = arith.truncf %35 : vector<8x32xf32> to vector<8x32xbf16>
    %cst_14 = arith.constant dense<0.000000e+00> : vector<8x128xf32>
    %40 = tpu.matmul %39, %3, %cst_14 {dimension_numbers = #tpu.dot_dimension_numbers<[1], [0], [0], [1], [0, 0, 1, 1], [], []>} : vector<8x32xbf16>, vector<32x128xbf16>, vector<8x128xf32> -> vector<8x128xf32>
    %41 = arith.addf %38, %40 : vector<8x128xf32>
    %cst_15 = arith.constant 5.000000e-01 : f32
    %42 = vector.broadcast %cst_15 : f32 to vector<8x128xf32>
    %43 = arith.mulf %42, %41 : vector<8x128xf32>
    %44 = arith.select %9, %41, %43 : vector<8x128xi1>, vector<8x128xf32>
    %45 = math.tanh %44 : vector<8x128xf32>
    %cst_16 = arith.constant 1.000000e+00 : f32
    %46 = vector.broadcast %cst_16 : f32 to vector<8x128xf32>
    %47 = arith.addf %45, %46 : vector<8x128xf32>
    %cst_17 = arith.constant 5.000000e-01 : f32
    %48 = vector.broadcast %cst_17 : f32 to vector<8x128xf32>
    %49 = arith.mulf %48, %47 : vector<8x128xf32>
    %50 = arith.select %9, %45, %49 : vector<8x128xi1>, vector<8x128xf32>
    %51 = vector.extract_strided_slice %50 {offsets = [0, 0], sizes = [8, 32], strides = [1, 1]} : vector<8x128xf32> to vector<8x32xf32>
    %52 = vector.extract_strided_slice %50 {offsets = [0, 32], sizes = [8, 32], strides = [1, 1]} : vector<8x128xf32> to vector<8x32xf32>
    %53 = vector.extract_strided_slice %50 {offsets = [0, 64], sizes = [8, 32], strides = [1, 1]} : vector<8x128xf32> to vector<8x32xf32>
    %54 = vector.extract_strided_slice %50 {offsets = [0, 96], sizes = [8, 32], strides = [1, 1]} : vector<8x128xf32> to vector<8x32xf32>
    %55 = arith.mulf %52, %33 : vector<8x32xf32>
    %56 = arith.mulf %51, %53 : vector<8x32xf32>
    %57 = arith.addf %55, %56 : vector<8x32xf32>
    %58 = math.tanh %57 : vector<8x32xf32>
    %59 = arith.mulf %54, %58 : vector<8x32xf32>
    %c2_i32 = arith.constant 2 : i32
    %60 = arith.index_cast %c2_i32 : i32 to index
    %c0_18 = arith.constant 0 : index
    %c0_19 = arith.constant 0 : index
    %61 = vector.load %arg2[%60, %c0_18, %c0_19] : memref<8x8x128xf32, #tpu.memory_space<vmem>>, vector<1x8x128xf32>
    %62 = vector.shape_cast %61 : vector<1x8x128xf32> to vector<8x128xf32>
    %63 = arith.truncf %59 : vector<8x32xf32> to vector<8x32xbf16>
    %cst_20 = arith.constant dense<0.000000e+00> : vector<8x128xf32>
    %64 = tpu.matmul %63, %3, %cst_20 {dimension_numbers = #tpu.dot_dimension_numbers<[1], [0], [0], [1], [0, 0, 1, 1], [], []>} : vector<8x32xbf16>, vector<32x128xbf16>, vector<8x128xf32> -> vector<8x128xf32>
    %65 = arith.addf %62, %64 : vector<8x128xf32>
    %cst_21 = arith.constant 5.000000e-01 : f32
    %66 = vector.broadcast %cst_21 : f32 to vector<8x128xf32>
    %67 = arith.mulf %66, %65 : vector<8x128xf32>
    %68 = arith.select %9, %65, %67 : vector<8x128xi1>, vector<8x128xf32>
    %69 = math.tanh %68 : vector<8x128xf32>
    %cst_22 = arith.constant 1.000000e+00 : f32
    %70 = vector.broadcast %cst_22 : f32 to vector<8x128xf32>
    %71 = arith.addf %69, %70 : vector<8x128xf32>
    %cst_23 = arith.constant 5.000000e-01 : f32
    %72 = vector.broadcast %cst_23 : f32 to vector<8x128xf32>
    %73 = arith.mulf %72, %71 : vector<8x128xf32>
    %74 = arith.select %9, %69, %73 : vector<8x128xi1>, vector<8x128xf32>
    %75 = vector.extract_strided_slice %74 {offsets = [0, 0], sizes = [8, 32], strides = [1, 1]} : vector<8x128xf32> to vector<8x32xf32>
    %76 = vector.extract_strided_slice %74 {offsets = [0, 32], sizes = [8, 32], strides = [1, 1]} : vector<8x128xf32> to vector<8x32xf32>
    %77 = vector.extract_strided_slice %74 {offsets = [0, 64], sizes = [8, 32], strides = [1, 1]} : vector<8x128xf32> to vector<8x32xf32>
    %78 = vector.extract_strided_slice %74 {offsets = [0, 96], sizes = [8, 32], strides = [1, 1]} : vector<8x128xf32> to vector<8x32xf32>
    %79 = arith.mulf %76, %57 : vector<8x32xf32>
    %80 = arith.mulf %75, %77 : vector<8x32xf32>
    %81 = arith.addf %79, %80 : vector<8x32xf32>
    %82 = math.tanh %81 : vector<8x32xf32>
    %83 = arith.mulf %78, %82 : vector<8x32xf32>
    %c3_i32 = arith.constant 3 : i32
    %84 = arith.index_cast %c3_i32 : i32 to index
    %c0_24 = arith.constant 0 : index
    %c0_25 = arith.constant 0 : index
    %85 = vector.load %arg2[%84, %c0_24, %c0_25] : memref<8x8x128xf32, #tpu.memory_space<vmem>>, vector<1x8x128xf32>
    %86 = vector.shape_cast %85 : vector<1x8x128xf32> to vector<8x128xf32>
    %87 = arith.truncf %83 : vector<8x32xf32> to vector<8x32xbf16>
    %cst_26 = arith.constant dense<0.000000e+00> : vector<8x128xf32>
    %88 = tpu.matmul %87, %3, %cst_26 {dimension_numbers = #tpu.dot_dimension_numbers<[1], [0], [0], [1], [0, 0, 1, 1], [], []>} : vector<8x32xbf16>, vector<32x128xbf16>, vector<8x128xf32> -> vector<8x128xf32>
    %89 = arith.addf %86, %88 : vector<8x128xf32>
    %cst_27 = arith.constant 5.000000e-01 : f32
    %90 = vector.broadcast %cst_27 : f32 to vector<8x128xf32>
    %91 = arith.mulf %90, %89 : vector<8x128xf32>
    %92 = arith.select %9, %89, %91 : vector<8x128xi1>, vector<8x128xf32>
    %93 = math.tanh %92 : vector<8x128xf32>
    %cst_28 = arith.constant 1.000000e+00 : f32
    %94 = vector.broadcast %cst_28 : f32 to vector<8x128xf32>
    %95 = arith.addf %93, %94 : vector<8x128xf32>
    %cst_29 = arith.constant 5.000000e-01 : f32
    %96 = vector.broadcast %cst_29 : f32 to vector<8x128xf32>
    %97 = arith.mulf %96, %95 : vector<8x128xf32>
    %98 = arith.select %9, %93, %97 : vector<8x128xi1>, vector<8x128xf32>
    %99 = vector.extract_strided_slice %98 {offsets = [0, 0], sizes = [8, 32], strides = [1, 1]} : vector<8x128xf32> to vector<8x32xf32>
    %100 = vector.extract_strided_slice %98 {offsets = [0, 32], sizes = [8, 32], strides = [1, 1]} : vector<8x128xf32> to vector<8x32xf32>
    %101 = vector.extract_strided_slice %98 {offsets = [0, 64], sizes = [8, 32], strides = [1, 1]} : vector<8x128xf32> to vector<8x32xf32>
    %102 = vector.extract_strided_slice %98 {offsets = [0, 96], sizes = [8, 32], strides = [1, 1]} : vector<8x128xf32> to vector<8x32xf32>
    %103 = arith.mulf %100, %81 : vector<8x32xf32>
    %104 = arith.mulf %99, %101 : vector<8x32xf32>
    %105 = arith.addf %103, %104 : vector<8x32xf32>
    %106 = math.tanh %105 : vector<8x32xf32>
    %107 = arith.mulf %102, %106 : vector<8x32xf32>
    %c4_i32 = arith.constant 4 : i32
    %108 = arith.index_cast %c4_i32 : i32 to index
    %c0_30 = arith.constant 0 : index
    %c0_31 = arith.constant 0 : index
    %109 = vector.load %arg2[%108, %c0_30, %c0_31] : memref<8x8x128xf32, #tpu.memory_space<vmem>>, vector<1x8x128xf32>
    %110 = vector.shape_cast %109 : vector<1x8x128xf32> to vector<8x128xf32>
    %111 = arith.truncf %107 : vector<8x32xf32> to vector<8x32xbf16>
    %cst_32 = arith.constant dense<0.000000e+00> : vector<8x128xf32>
    %112 = tpu.matmul %111, %3, %cst_32 {dimension_numbers = #tpu.dot_dimension_numbers<[1], [0], [0], [1], [0, 0, 1, 1], [], []>} : vector<8x32xbf16>, vector<32x128xbf16>, vector<8x128xf32> -> vector<8x128xf32>
    %113 = arith.addf %110, %112 : vector<8x128xf32>
    %cst_33 = arith.constant 5.000000e-01 : f32
    %114 = vector.broadcast %cst_33 : f32 to vector<8x128xf32>
    %115 = arith.mulf %114, %113 : vector<8x128xf32>
    %116 = arith.select %9, %113, %115 : vector<8x128xi1>, vector<8x128xf32>
    %117 = math.tanh %116 : vector<8x128xf32>
    %cst_34 = arith.constant 1.000000e+00 : f32
    %118 = vector.broadcast %cst_34 : f32 to vector<8x128xf32>
    %119 = arith.addf %117, %118 : vector<8x128xf32>
    %cst_35 = arith.constant 5.000000e-01 : f32
    %120 = vector.broadcast %cst_35 : f32 to vector<8x128xf32>
    %121 = arith.mulf %120, %119 : vector<8x128xf32>
    %122 = arith.select %9, %117, %121 : vector<8x128xi1>, vector<8x128xf32>
    %123 = vector.extract_strided_slice %122 {offsets = [0, 0], sizes = [8, 32], strides = [1, 1]} : vector<8x128xf32> to vector<8x32xf32>
    %124 = vector.extract_strided_slice %122 {offsets = [0, 32], sizes = [8, 32], strides = [1, 1]} : vector<8x128xf32> to vector<8x32xf32>
    %125 = vector.extract_strided_slice %122 {offsets = [0, 64], sizes = [8, 32], strides = [1, 1]} : vector<8x128xf32> to vector<8x32xf32>
    %126 = vector.extract_strided_slice %122 {offsets = [0, 96], sizes = [8, 32], strides = [1, 1]} : vector<8x128xf32> to vector<8x32xf32>
    %127 = arith.mulf %124, %105 : vector<8x32xf32>
    %128 = arith.mulf %123, %125 : vector<8x32xf32>
    %129 = arith.addf %127, %128 : vector<8x32xf32>
    %130 = math.tanh %129 : vector<8x32xf32>
    %131 = arith.mulf %126, %130 : vector<8x32xf32>
    %c5_i32 = arith.constant 5 : i32
    %132 = arith.index_cast %c5_i32 : i32 to index
    %c0_36 = arith.constant 0 : index
    %c0_37 = arith.constant 0 : index
    %133 = vector.load %arg2[%132, %c0_36, %c0_37] : memref<8x8x128xf32, #tpu.memory_space<vmem>>, vector<1x8x128xf32>
    %134 = vector.shape_cast %133 : vector<1x8x128xf32> to vector<8x128xf32>
    %135 = arith.truncf %131 : vector<8x32xf32> to vector<8x32xbf16>
    %cst_38 = arith.constant dense<0.000000e+00> : vector<8x128xf32>
    %136 = tpu.matmul %135, %3, %cst_38 {dimension_numbers = #tpu.dot_dimension_numbers<[1], [0], [0], [1], [0, 0, 1, 1], [], []>} : vector<8x32xbf16>, vector<32x128xbf16>, vector<8x128xf32> -> vector<8x128xf32>
    %137 = arith.addf %134, %136 : vector<8x128xf32>
    %cst_39 = arith.constant 5.000000e-01 : f32
    %138 = vector.broadcast %cst_39 : f32 to vector<8x128xf32>
    %139 = arith.mulf %138, %137 : vector<8x128xf32>
    %140 = arith.select %9, %137, %139 : vector<8x128xi1>, vector<8x128xf32>
    %141 = math.tanh %140 : vector<8x128xf32>
    %cst_40 = arith.constant 1.000000e+00 : f32
    %142 = vector.broadcast %cst_40 : f32 to vector<8x128xf32>
    %143 = arith.addf %141, %142 : vector<8x128xf32>
    %cst_41 = arith.constant 5.000000e-01 : f32
    %144 = vector.broadcast %cst_41 : f32 to vector<8x128xf32>
    %145 = arith.mulf %144, %143 : vector<8x128xf32>
    %146 = arith.select %9, %141, %145 : vector<8x128xi1>, vector<8x128xf32>
    %147 = vector.extract_strided_slice %146 {offsets = [0, 0], sizes = [8, 32], strides = [1, 1]} : vector<8x128xf32> to vector<8x32xf32>
    %148 = vector.extract_strided_slice %146 {offsets = [0, 32], sizes = [8, 32], strides = [1, 1]} : vector<8x128xf32> to vector<8x32xf32>
    %149 = vector.extract_strided_slice %146 {offsets = [0, 64], sizes = [8, 32], strides = [1, 1]} : vector<8x128xf32> to vector<8x32xf32>
    %150 = vector.extract_strided_slice %146 {offsets = [0, 96], sizes = [8, 32], strides = [1, 1]} : vector<8x128xf32> to vector<8x32xf32>
    %151 = arith.mulf %148, %129 : vector<8x32xf32>
    %152 = arith.mulf %147, %149 : vector<8x32xf32>
    %153 = arith.addf %151, %152 : vector<8x32xf32>
    %154 = math.tanh %153 : vector<8x32xf32>
    %155 = arith.mulf %150, %154 : vector<8x32xf32>
    %c6_i32 = arith.constant 6 : i32
    %156 = arith.index_cast %c6_i32 : i32 to index
    %c0_42 = arith.constant 0 : index
    %c0_43 = arith.constant 0 : index
    %157 = vector.load %arg2[%156, %c0_42, %c0_43] : memref<8x8x128xf32, #tpu.memory_space<vmem>>, vector<1x8x128xf32>
    %158 = vector.shape_cast %157 : vector<1x8x128xf32> to vector<8x128xf32>
    %159 = arith.truncf %155 : vector<8x32xf32> to vector<8x32xbf16>
    %cst_44 = arith.constant dense<0.000000e+00> : vector<8x128xf32>
    %160 = tpu.matmul %159, %3, %cst_44 {dimension_numbers = #tpu.dot_dimension_numbers<[1], [0], [0], [1], [0, 0, 1, 1], [], []>} : vector<8x32xbf16>, vector<32x128xbf16>, vector<8x128xf32> -> vector<8x128xf32>
    %161 = arith.addf %158, %160 : vector<8x128xf32>
    %cst_45 = arith.constant 5.000000e-01 : f32
    %162 = vector.broadcast %cst_45 : f32 to vector<8x128xf32>
    %163 = arith.mulf %162, %161 : vector<8x128xf32>
    %164 = arith.select %9, %161, %163 : vector<8x128xi1>, vector<8x128xf32>
    %165 = math.tanh %164 : vector<8x128xf32>
    %cst_46 = arith.constant 1.000000e+00 : f32
    %166 = vector.broadcast %cst_46 : f32 to vector<8x128xf32>
    %167 = arith.addf %165, %166 : vector<8x128xf32>
    %cst_47 = arith.constant 5.000000e-01 : f32
    %168 = vector.broadcast %cst_47 : f32 to vector<8x128xf32>
    %169 = arith.mulf %168, %167 : vector<8x128xf32>
    %170 = arith.select %9, %165, %169 : vector<8x128xi1>, vector<8x128xf32>
    %171 = vector.extract_strided_slice %170 {offsets = [0, 0], sizes = [8, 32], strides = [1, 1]} : vector<8x128xf32> to vector<8x32xf32>
    %172 = vector.extract_strided_slice %170 {offsets = [0, 32], sizes = [8, 32], strides = [1, 1]} : vector<8x128xf32> to vector<8x32xf32>
    %173 = vector.extract_strided_slice %170 {offsets = [0, 64], sizes = [8, 32], strides = [1, 1]} : vector<8x128xf32> to vector<8x32xf32>
    %174 = vector.extract_strided_slice %170 {offsets = [0, 96], sizes = [8, 32], strides = [1, 1]} : vector<8x128xf32> to vector<8x32xf32>
    %175 = arith.mulf %172, %153 : vector<8x32xf32>
    %176 = arith.mulf %171, %173 : vector<8x32xf32>
    %177 = arith.addf %175, %176 : vector<8x32xf32>
    %178 = math.tanh %177 : vector<8x32xf32>
    %179 = arith.mulf %174, %178 : vector<8x32xf32>
    %c7_i32 = arith.constant 7 : i32
    %180 = arith.index_cast %c7_i32 : i32 to index
    %c0_48 = arith.constant 0 : index
    %c0_49 = arith.constant 0 : index
    %181 = vector.load %arg2[%180, %c0_48, %c0_49] : memref<8x8x128xf32, #tpu.memory_space<vmem>>, vector<1x8x128xf32>
    %182 = vector.shape_cast %181 : vector<1x8x128xf32> to vector<8x128xf32>
    %183 = arith.truncf %179 : vector<8x32xf32> to vector<8x32xbf16>
    %cst_50 = arith.constant dense<0.000000e+00> : vector<8x128xf32>
    %184 = tpu.matmul %183, %3, %cst_50 {dimension_numbers = #tpu.dot_dimension_numbers<[1], [0], [0], [1], [0, 0, 1, 1], [], []>} : vector<8x32xbf16>, vector<32x128xbf16>, vector<8x128xf32> -> vector<8x128xf32>
    %185 = arith.addf %182, %184 : vector<8x128xf32>
    %cst_51 = arith.constant 5.000000e-01 : f32
    %186 = vector.broadcast %cst_51 : f32 to vector<8x128xf32>
    %187 = arith.mulf %186, %185 : vector<8x128xf32>
    %188 = arith.select %9, %185, %187 : vector<8x128xi1>, vector<8x128xf32>
    %189 = math.tanh %188 : vector<8x128xf32>
    %cst_52 = arith.constant 1.000000e+00 : f32
    %190 = vector.broadcast %cst_52 : f32 to vector<8x128xf32>
    %191 = arith.addf %189, %190 : vector<8x128xf32>
    %cst_53 = arith.constant 5.000000e-01 : f32
    %192 = vector.broadcast %cst_53 : f32 to vector<8x128xf32>
    %193 = arith.mulf %192, %191 : vector<8x128xf32>
    %194 = arith.select %9, %189, %193 : vector<8x128xi1>, vector<8x128xf32>
    %195 = vector.extract_strided_slice %194 {offsets = [0, 0], sizes = [8, 32], strides = [1, 1]} : vector<8x128xf32> to vector<8x32xf32>
    %196 = vector.extract_strided_slice %194 {offsets = [0, 32], sizes = [8, 32], strides = [1, 1]} : vector<8x128xf32> to vector<8x32xf32>
    %197 = vector.extract_strided_slice %194 {offsets = [0, 64], sizes = [8, 32], strides = [1, 1]} : vector<8x128xf32> to vector<8x32xf32>
    %198 = vector.extract_strided_slice %194 {offsets = [0, 96], sizes = [8, 32], strides = [1, 1]} : vector<8x128xf32> to vector<8x32xf32>
    %199 = arith.mulf %196, %177 : vector<8x32xf32>
    %200 = arith.mulf %195, %197 : vector<8x32xf32>
    %201 = arith.addf %199, %200 : vector<8x32xf32>
    %202 = math.tanh %201 : vector<8x32xf32>
    %203 = arith.mulf %198, %202 : vector<8x32xf32>
    %c8_i32 = arith.constant 8 : i32
    %c0_54 = arith.constant 0 : index
    %c0_55 = arith.constant 0 : index
    %204 = vector.load %arg4[%c0_54, %c0_55] : memref<8x32xf32, #tpu.memory_space<vmem>>, vector<8x32xf32>
    tpu.vector_store %arg4[%c0_54, %c0_55], %203 {strides = array<i32>} : memref<8x32xf32, #tpu.memory_space<vmem>>, vector<8x32xf32>,
    %c0_56 = arith.constant 0 : index
    %c0_57 = arith.constant 0 : index
    %205 = vector.load %arg5[%c0_56, %c0_57] : memref<8x32xf32, #tpu.memory_space<vmem>>, vector<8x32xf32>
    tpu.vector_store %arg5[%c0_56, %c0_57], %201 {strides = array<i32>} : memref<8x32xf32, #tpu.memory_space<vmem>>, vector<8x32xf32>,
    return
  }
  func.func @transform_0(%arg0: i32, %arg1: i32) -> (i32, i32, i32) {
    %c0_i32 = arith.constant 0 : i32
    %c0_i32_0 = arith.constant 0 : i32
    return %arg1, %arg0, %c0_i32 : i32, i32, i32
  }
  func.func @transform_1(%arg0: i32, %arg1: i32) -> (i32, i32) {
    %c0_i32 = arith.constant 0 : i32
    %c0_i32_0 = arith.constant 0 : i32
    %c0_i32_1 = arith.constant 0 : i32
    return %c0_i32, %c0_i32_0 : i32, i32
  }
  func.func @transform_2(%arg0: i32, %arg1: i32) -> (i32, i32) {
    %c0_i32 = arith.constant 0 : i32
    %c0_i32_0 = arith.constant 0 : i32
    return %arg0, %c0_i32 : i32, i32
  }
}

</mosaic_0001>

<llo_original>
// kernel: rnn_lstm_forward.1
$region0: #{rnn_lstm_forward.1}
  #allocation0 [shape = 'u32[]', space=smem, size = 0x4, offset = 0x4, fixed_abs, tag = 'smem constant byte address 0x4 - core index']
  #allocation1 [shape = 'u32[144,128]{1,0:T(1,128)}', space=vmem, size = 0x12000, scoped, tag = 'internal scratch']
  #allocation2 [shape = 'f32[8,32]{1,0:T(8,128)}', space=vmem, size = 0x1000, scoped, tag = 'scratch operand']
  %s0 = inlined_call_operand.vmem [shape: f32[16,8,128], index: 0, kind: input, shape index: {}]
  %s1 = inlined_call_operand.vmem [shape: bf16[32,128], index: 1, kind: input, shape index: {}]
  %s2 = inlined_call_operand.vmem [shape: f32[8,32], index: 2, kind: output, shape index: {}]
  %s3 = sld [smem:[#allocation0]]
  $region45: #{rnn_lstm_forward.1} parent=0
    _
  %s5 = ssub.s32 1, %s3
  %s6 = scalar_select 0, %s5, %s3
  loop: start=0, step=1, limit=4
  $region2: #{rnn_lstm_forward.1} parent=0 // loop_pre_header
    _
  $region3: #{rnn_lstm_forward.1} parent=0 // loop_header
    %s8 = sphi 0, %s12
    %p9 = scmp.ge.s32.totalorder %s8, 4
    %s15 = sphi 0, %s27
    %s16 = sphi 0, %s23
    %s17 = sphi 0, %s15
    %s18 = sphi 0, %s16
    %s19 = sphi 0, %s17
    %s20 = sphi 0, %s18
    %s32 = sphi 0, %s34
    %s35 = sphi 0, %s32
    %s36 = sphi 0, %s35
    %s52 = sphi 0, %s36
    %s56 = sphi 0, %s56
    %s58 = sphi 0, %s56
    %s59 = sphi 0, %s58
    %s73 = sphi 0, %s59
    %s79 = sphi 0, %s81
    %s82 = sphi 0, %s79
    %s83 = sphi 0, %s82
    %s99 = sphi 0, %s83
  $region4: #{rnn_lstm_forward.1} parent=0 // loop_header_branch
    %11 = sbr.rel (%p9) target = $region8
  $region5: #{rnn_lstm_forward.1} parent=0 // loop_body
    %s13 = ssub.s32 %s8, 1
    %s14 = ssub.s32 %s8, 2
    %s21 = sadd.s32 1, %s16
    %p22 = scmp.ge.s32.totalorder %s21, 2
    %s23 = scalar_select %p22, 0, %s21
    %s24 = sadd.s32 1, %s15
    %s25 = scalar_select %p22, %s24, %s15
    %p26 = scmp.ge.s32.totalorder %s25, 1
    %s27 = scalar_select %p26, 0, %s25
    %s28 = ssub.s32 %s16, %s23
    %s29 = ssub.s32 %s15, %s27
    %s30 = sor.u32 %s28, %s29
    %p31 = scmp.eq.s32.totalorder %s30, 0
    %s33 = sadd.s32 %s32, 1
    %s34 = scalar_select %p31, %s32, %s33
    %p37 = pneg %p31
    %p38 = scmp.eq.s32.totalorder %s8, 1
    %p39 = por %p37, %p38
    %p40 = scmp.ne.s32.totalorder %s32, %s35
    %p41 = scmp.eq.s32.totalorder %s8, 0
    %p42 = por %p40, %p41
    %p43 = scmp.ne.s32.totalorder %s32, %s35
    %p44 = scmp.eq.s32.totalorder %s13, 1
    %p45 = por %p43, %p44
    %p46 = scmp.ne.s32.totalorder %s35, %s36
    %p47 = scmp.eq.s32.totalorder %s13, 0
    %p48 = por %p46, %p47
    %p49 = scmp.ne.s32.totalorder %s35, %s36
    %p50 = scmp.eq.s32.totalorder %s14, 1
    %p51 = por %p49, %p50
    %p53 = scmp.ne.s32.totalorder %s36, %s52
    %p54 = scmp.eq.s32.totalorder %s14, 0
    %p55 = por %p53, %p54
    %s57 = sadd.s32 %s56, 1
    %p60 = scmp.eq.s32.totalorder %s8, 1
    %p61 = scmp.ne.s32.totalorder %s56, %s58
    %p62 = scmp.eq.s32.totalorder %s8, 0
    %p63 = por %p61, %p62
    %p64 = scmp.ne.s32.totalorder %s56, %s58
    %p65 = scmp.eq.s32.totalorder %s13, 1
    %p66 = por %p64, %p65
    %p67 = scmp.ne.s32.totalorder %s58, %s59
    %p68 = scmp.eq.s32.totalorder %s13, 0
    %p69 = por %p67, %p68
    %p70 = scmp.ne.s32.totalorder %s58, %s59
    %p71 = scmp.eq.s32.totalorder %s14, 1
    %p72 = por %p70, %p71
    %p74 = scmp.ne.s32.totalorder %s59, %s73
    %p75 = scmp.eq.s32.totalorder %s14, 0
    %p76 = por %p74, %p75
    %s77 = ssub.s32 %s15, %s27
    %p78 = scmp.eq.s32.totalorder %s77, 0
    %s80 = sadd.s32 %s79, 1
    %s81 = scalar_select %p78, %s79, %s80
    %p84 = pneg %p78
    %p85 = scmp.eq.s32.totalorder %s8, 1
    %p86 = por %p84, %p85
    %p87 = scmp.ne.s32.totalorder %s79, %s82
    %p88 = scmp.eq.s32.totalorder %s8, 0
    %p89 = por %p87, %p88
    %p90 = scmp.ne.s32.totalorder %s79, %s82
    %p91 = scmp.eq.s32.totalorder %s13, 1
    %p92 = por %p90, %p91
    %p93 = scmp.ne.s32.totalorder %s82, %s83
    %p94 = scmp.eq.s32.totalorder %s13, 0
    %p95 = por %p93, %p94
    %p96 = scmp.ne.s32.totalorder %s82, %s83
    %p97 = scmp.eq.s32.totalorder %s14, 1
    %p98 = por %p96, %p97
    %p100 = scmp.ne.s32.totalorder %s83, %s99
    %p101 = scmp.eq.s32.totalorder %s14, 0
    %p102 = por %p100, %p101
    %p103 = scmp.le.s32.totalorder 1, %s8
    %p104 = scmp.lt.s32.totalorder %s8, 3
    %p105 = pnand %p103, %p104
    %p106 = pneg %p105
    // Predicated region
    $region9: #{rnn_lstm_forward.1} parent=5 // pred_check
      _
    $region10: #{rnn_lstm_forward.1} parent=5 // pred_check_branch
      %108 = sbr.rel (%p105) target = $region12
    $region11: #{rnn_lstm_forward.1} parent=5 // pred_region
      %s109 = ssub.s32 %s8, 1
      // Predicated region
      $region13: #{rnn_lstm_forward.1} parent=11 // pred_check
        %p110 = pneg %p69
      $region14: #{rnn_lstm_forward.1} parent=11 // pred_check_branch
        %112 = sbr.rel (%p110) target = $region16
      $region15: #{rnn_lstm_forward.1} parent=11 // pred_region
        _
      $region16: #{rnn_lstm_forward.1} parent=11 // pred_fallthru
        _
    $region12: #{rnn_lstm_forward.1} parent=5 // pred_fallthru
      _
    %p113 = scmp.lt.s32.totalorder %s8, 2
    // Predicated region
    $region17: #{rnn_lstm_forward.1} parent=5 // pred_check
      %p114 = pneg %p113
    $region18: #{rnn_lstm_forward.1} parent=5 // pred_check_branch
      %116 = sbr.rel (%p114) target = $region20
    $region19: #{rnn_lstm_forward.1} parent=5 // pred_region
      // Predicated region
      $region21: #{rnn_lstm_forward.1} parent=19 // pred_check
        %p117 = pneg %p42
      $region22: #{rnn_lstm_forward.1} parent=19 // pred_check_branch
        %119 = sbr.rel (%p117) target = $region24
      $region23: #{rnn_lstm_forward.1} parent=19 // pred_region
        %s120 = smul.u32 8, %s16
        %p121 = scmp.lt.s32.totalorder %s120, 15
        %s122 = scalar_select %p121, %s120, 15
        %p123 = scmp.lt.s32.totalorder %s15, 0
        %s124 = scalar_select %p123, %s15, 0
        %s125 = sadd.s32 %s124, %s122
        %s126 = smul.addr %s125, 8
        %s127 = scalar_lea.vmem %s0, %s126
        %s128 = smul.u32 8, %s16
      $region24: #{rnn_lstm_forward.1} parent=19 // pred_fallthru
        _
    $region20: #{rnn_lstm_forward.1} parent=5 // pred_fallthru
      _
    %p129 = scmp.le.s32.totalorder 1, %s8
    %p130 = scmp.lt.s32.totalorder %s8, 3
    %p131 = pnand %p129, %p130
    %p132 = pneg %p131
    // Predicated region
    $region25: #{rnn_lstm_forward.1} parent=5 // pred_check
      _
    $region26: #{rnn_lstm_forward.1} parent=5 // pred_check_branch
      %134 = sbr.rel (%p131) target = $region28
    $region27: #{rnn_lstm_forward.1} parent=5 // pred_region
      %s135 = ssub.s32 %s8, 1
      %s136 = smul.u32 8, %s18
      %p137 = scmp.lt.s32.totalorder %s136, 15
      %s138 = scalar_select %p137, %s136, 15
      %p139 = scmp.lt.s32.totalorder %s17, 0
      %s140 = scalar_select %p139, %s17, 0
      %s141 = sadd.s32 %s140, %s138
      %s142 = smul.addr %s141, 8
      %s143 = scalar_lea.vmem %s0, %s142
      %p144 = pneg %p48
      %p145 = pneg %p45
      %p146 = pneg %p69
      %p147 = pneg %p66
      %p148 = pneg %p95
      %p149 = pneg %p92
      %p150 = scmp.lt.s32.totalorder %s17, 0
      %s151 = scalar_select %p150, %s17, 0
      %s152 = smul.addr %s151, 8
      %s153 = scalar_lea.vmem %s2, %s152
      %s154 = smul.u32 8, %s18
      %p155 = scmp.lt.s32.totalorder %s154, 15
      %s156 = scalar_select %p155, %s154, 15
      %p157 = scmp.lt.s32.totalorder %s17, 0
      %s158 = scalar_select %p157, %s17, 0
      %s159 = sadd.s32 %s158, %s156
      %s160 = smul.addr %s159, 8
      %s161 = scalar_lea.vmem %s0, %s160
      %s162 = smul.u32 8, %s18
      %p163 = scmp.lt.s32.totalorder %s17, 0
      %s164 = scalar_select %p163, %s17, 0
      %s165 = smul.addr %s164, 8
      %s166 = scalar_lea.vmem %s2, %s165
      %p168 = scmp.eq.s32.totalorder %s18, 0
      // Predicated region
      $region29: #{rnn_lstm_forward.1} parent=27 // pred_check
        %p169 = pneg %p168
      $region30: #{rnn_lstm_forward.1} parent=27 // pred_check_branch
        %171 = sbr.rel (%p169) target = $region32
      $region31: #{rnn_lstm_forward.1} parent=27 // pred_region
        %vm172 = vcmask 261120
        %173 = vst.msk [vmem:[%s166] sm:$0xff] %vm172, 0.0
        %174 = vst.msk [vmem:[#allocation2] sm:$0xff] %vm172, 0.0
      $region32: #{rnn_lstm_forward.1} parent=27 // pred_fallthru
        _
      %v175 = vld [vmem:[%s1] sm:$0xf]
      %v176 = vld [vmem:[%s1 + $0x4] sm:$0xf]
      %v177 = vld [vmem:[%s1 + $0x8] sm:$0xf]
      %v178 = vld [vmem:[%s1 + $0xc] sm:$0xf]
      %v179 = vlaneseq
      %v180 = vand.u32 %v179, 127
      %vm181 = vcmp.ge.s32.totalorder %v180, 64
      %vm182 = vcmp.lt.s32.totalorder %v180, 96
      %vm183 = vmand %vm181, %vm182
      %v184 = vld [vmem:[%s166] sm:$0xff]
      %v185 = vld [vmem:[#allocation2] sm:$0xff]
      %v186 = vld [vmem:[%s161] sm:$0xff]
      %v187 = vpack.c.bf16 %v184, %v184
      %v192 = vunpack.c.l.b16 %v175
      %v193 = vunpack.c.l.b16 %v176
      %v194 = vunpack.c.l.b16 %v177
      %v195 = vunpack.c.l.b16 %v178
      %v196 = vpack.c.b16 %v193, %v192
      %v197 = vpack.c.b16 %v195, %v194
      %vm200 = vcmask 261120
      %v202 = vsel %vm200, %v187, 0
      %204 = vmatprep.subr.bf16.mxu0 0
      %205 = vmatpush1.bf16.msra.mxu0 %v196
      %206 = vmatprep.subr.bf16.mxu0 0
      %207 = vmatpush1.bf16.msra.mxu0 %v197
      %208 = vmatprep.subr.bf16.mxu0 0
      %209 = vmatpush1.bf16.msra.mxu0 0
      %210 = vmatprep.subr.bf16.mxu0 0
      %211 = vmatpush1.bf16.msra.mxu0 0
      %212 = vmatprep.subr.bf16.mxu0 0
      %213 = vmatpush1.bf16.msra.mxu0 0
      %214 = vmatprep.subr.bf16.mxu0 0
      %215 = vmatpush1.bf16.msra.mxu0 0
      %216 = vmatprep.subr.bf16.mxu0 0
      %217 = vmatpush1.bf16.msra.mxu0 0
      %218 = vmatprep.subr.bf16.mxu0 0
      %219 = vmatpush1.bf16.msra.mxu0 0
      %220 = vmatprep.subr.bf16.mxu0 0
      %221 = vmatpush1.bf16.msra.mxu0 0
      %222 = vmatprep.subr.bf16.mxu0 0
      %223 = vmatpush1.bf16.msra.mxu0 0
      %224 = vmatprep.subr.bf16.mxu0 0
      %225 = vmatpush1.bf16.msra.mxu0 0
      %226 = vmatprep.subr.bf16.mxu0 0
      %227 = vmatpush1.bf16.msra.mxu0 0
      %228 = vmatprep.subr.bf16.mxu0 0
      %229 = vmatpush1.bf16.msra.mxu0 0
      %230 = vmatprep.subr.bf16.mxu0 0
      %231 = vmatpush1.bf16.msra.mxu0 0
      %232 = vmatprep.subr.bf16.mxu0 0
      %233 = vmatpush1.bf16.msra.mxu0 0
      %234 = vmatprep.subr.bf16.mxu0 0
      %235 = vmatpush1.bf16.msra.mxu0 0
      %236 = vmatprep.mubr.bf16.mxu0 0
      %237 = vmatmul.mubr.bf16.gmra.mrb[0].mxu0 %v202
      %v238 = vpop.f32.mrb[0].mxu0
      %v239 = vadd.f32 0.0, %v238
      %v240 = vpop.f32.mrb[0].mxu0
      %v241 = vpop.f32.mrb[0].mxu0
      %v242 = vpop.f32.mrb[0].mxu0
      %243 = vdwg.mxu0
      %v244 = vadd.f32 %v186, %v239
      %v245 = vmul.f32 %v244, 0.5
      %v246 = vsel %vm183, %v244, %v245
      %v247 = vtanh.pop %v246
      %v248 = vadd.f32 %v247, 1.0
      %v249 = vmul.f32 %v248, 0.5
      %v250 = vsel %vm183, %v247, %v249
      %252 = vrot.lane.b32.xlu0 %v185, 32
      %v253 = vpop.permute.xlu0 %252
      %v255 = vmul.f32 %v250, %v253
      %257 = vrot.lane.b32.xlu0 %v250, 64
      %v258 = vpop.permute.xlu0 %257
      %v260 = vmul.f32 %v250, %v258
      %262 = vrot.lane.b32.xlu0 %v260, 32
      %v263 = vpop.permute.xlu0 %262
      %v265 = vadd.f32 %v255, %v263
      %v266 = vtanh.pop %v265
      %268 = vrot.lane.b32.xlu0 %v266, 64
      %v269 = vpop.permute.xlu0 %268
      %v271 = vmul.f32 %v250, %v269
      %s272 = scalar_lea.vmem %s161, 8
      %v273 = vld [vmem:[%s272] sm:$0xff]
      %v274 = vpack.c.bf16 %v271, %v271
      %276 = vrot.lane.b32.xlu0 %v274, 32
      %v277 = vpop.permute.xlu0 %276
      %v279 = vsel %vm200, %v277, 0
      %281 = vmatprep.subr.bf16.mxu0 0
      %282 = vmatpush1.bf16.msra.mxu0 %v196
      %283 = vmatprep.subr.bf16.mxu0 0
      %284 = vmatpush1.bf16.msra.mxu0 %v197
      %285 = vmatprep.subr.bf16.mxu0 0
      %286 = vmatpush1.bf16.msra.mxu0 0
      %287 = vmatprep.subr.bf16.mxu0 0
      %288 = vmatpush1.bf16.msra.mxu0 0
      %289 = vmatprep.subr.bf16.mxu0 0
      %290 = vmatpush1.bf16.msra.mxu0 0
      %291 = vmatprep.subr.bf16.mxu0 0
      %292 = vmatpush1.bf16.msra.mxu0 0
      %293 = vmatprep.subr.bf16.mxu0 0
      %294 = vmatpush1.bf16.msra.mxu0 0
      %295 = vmatprep.subr.bf16.mxu0 0
      %296 = vmatpush1.bf16.msra.mxu0 0
      %297 = vmatprep.subr.bf16.mxu0 0
      %298 = vmatpush1.bf16.msra.mxu0 0
      %299 = vmatprep.subr.bf16.mxu0 0
      %300 = vmatpush1.bf16.msra.mxu0 0
      %301 = vmatprep.subr.bf16.mxu0 0
      %302 = vmatpush1.bf16.msra.mxu0 0
      %303 = vmatprep.subr.bf16.mxu0 0
      %304 = vmatpush1.bf16.msra.mxu0 0
      %305 = vmatprep.subr.bf16.mxu0 0
      %306 = vmatpush1.bf16.msra.mxu0 0
      %307 = vmatprep.subr.bf16.mxu0 0
      %308 = vmatpush1.bf16.msra.mxu0 0
      %309 = vmatprep.subr.bf16.mxu0 0
      %310 = vmatpush1.bf16.msra.mxu0 0
      %311 = vmatprep.subr.bf16.mxu0 0
      %312 = vmatpush1.bf16.msra.mxu0 0
      %313 = vmatprep.mubr.bf16.mxu0 0
      %314 = vmatmul.mubr.bf16.gmra.mrb[0].mxu0 %v279
      %v315 = vpop.f32.mrb[0].mxu0
      %v316 = vadd.f32 0.0, %v315
      %v317 = vpop.f32.mrb[0].mxu0
      %v318 = vpop.f32.mrb[0].mxu0
      %v319 = vpop.f32.mrb[0].mxu0
      %320 = vdwg.mxu0
      %v321 = vadd.f32 %v273, %v316
      %v322 = vmul.f32 %v321, 0.5
      %v323 = vsel %vm183, %v321, %v322
      %v324 = vtanh.pop %v323
      %v325 = vadd.f32 %v324, 1.0
      %v326 = vmul.f32 %v325, 0.5
      %v327 = vsel %vm183, %v324, %v326
      %v328 = vmul.f32 %v327, %v265
      %330 = vrot.lane.b32.xlu0 %v327, 64
      %v331 = vpop.permute.xlu0 %330
      %v333 = vmul.f32 %v327, %v331
      %335 = vrot.lane.b32.xlu0 %v333, 32
      %v336 = vpop.permute.xlu0 %335
      %v338 = vadd.f32 %v328, %v336
      %v339 = vtanh.pop %v338
      %341 = vrot.lane.b32.xlu0 %v339, 64
      %v342 = vpop.permute.xlu0 %341
      %v344 = vmul.f32 %v327, %v342
      %s345 = scalar_lea.vmem %s161, 16
      %v346 = vld [vmem:[%s345] sm:$0xff]
      %v347 = vpack.c.bf16 %v344, %v344
      %349 = vrot.lane.b32.xlu0 %v347, 32
      %v350 = vpop.permute.xlu0 %349
      %v352 = vsel %vm200, %v350, 0
      %354 = vmatprep.subr.bf16.mxu0 0
      %355 = vmatpush1.bf16.msra.mxu0 %v196
      %356 = vmatprep.subr.bf16.mxu0 0
      %357 = vmatpush1.bf16.msra.mxu0 %v197
      %358 = vmatprep.subr.bf16.mxu0 0
      %359 = vmatpush1.bf16.msra.mxu0 0
      %360 = vmatprep.subr.bf16.mxu0 0
      %361 = vmatpush1.bf16.msra.mxu0 0
      %362 = vmatprep.subr.bf16.mxu0 0
      %363 = vmatpush1.bf16.msra.mxu0 0
      %364 = vmatprep.subr.bf16.mxu0 0
      %365 = vmatpush1.bf16.msra.mxu0 0
      %366 = vmatprep.subr.bf16.mxu0 0
      %367 = vmatpush1.bf16.msra.mxu0 0
      %368 = vmatprep.subr.bf16.mxu0 0
      %369 = vmatpush1.bf16.msra.mxu0 0
      %370 = vmatprep.subr.bf16.mxu0 0
      %371 = vmatpush1.bf16.msra.mxu0 0
      %372 = vmatprep.subr.bf16.mxu0 0
      %373 = vmatpush1.bf16.msra.mxu0 0
      %374 = vmatprep.subr.bf16.mxu0 0
      %375 = vmatpush1.bf16.msra.mxu0 0
      %376 = vmatprep.subr.bf16.mxu0 0
      %377 = vmatpush1.bf16.msra.mxu0 0
      %378 = vmatprep.subr.bf16.mxu0 0
      %379 = vmatpush1.bf16.msra.mxu0 0
      %380 = vmatprep.subr.bf16.mxu0 0
      %381 = vmatpush1.bf16.msra.mxu0 0
      %382 = vmatprep.subr.bf16.mxu0 0
      %383 = vmatpush1.bf16.msra.mxu0 0
      %384 = vmatprep.subr.bf16.mxu0 0
      %385 = vmatpush1.bf16.msra.mxu0 0
      %386 = vmatprep.mubr.bf16.mxu0 0
      %387 = vmatmul.mubr.bf16.gmra.mrb[0].mxu0 %v352
      %v388 = vpop.f32.mrb[0].mxu0
      %v389 = vadd.f32 0.0, %v388
      %v390 = vpop.f32.mrb[0].mxu0
      %v391 = vpop.f32.mrb[0].mxu0
      %v392 = vpop.f32.mrb[0].mxu0
      %393 = vdwg.mxu0
      %v394 = vadd.f32 %v346, %v389
      %v395 = vmul.f32 %v394, 0.5
      %v396 = vsel %vm183, %v394, %v395
      %v397 = vtanh.pop %v396
      %v398 = vadd.f32 %v397, 1.0
      %v399 = vmul.f32 %v398, 0.5
      %v400 = vsel %vm183, %v397, %v399
      %v401 = vmul.f32 %v400, %v338
      %403 = vrot.lane.b32.xlu0 %v400, 64
      %v404 = vpop.permute.xlu0 %403
      %v406 = vmul.f32 %v400, %v404
      %408 = vrot.lane.b32.xlu0 %v406, 32
      %v409 = vpop.permute.xlu0 %408
      %v411 = vadd.f32 %v401, %v409
      %v412 = vtanh.pop %v411
      %414 = vrot.lane.b32.xlu0 %v412, 64
      %v415 = vpop.permute.xlu0 %414
      %v417 = vmul.f32 %v400, %v415
      %s418 = scalar_lea.vmem %s161, 24
      %v419 = vld [vmem:[%s418] sm:$0xff]
      %v420 = vpack.c.bf16 %v417, %v417
      %422 = vrot.lane.b32.xlu0 %v420, 32
      %v423 = vpop.permute.xlu0 %422
      %v425 = vsel %vm200, %v423, 0
      %427 = vmatprep.subr.bf16.mxu0 0
      %428 = vmatpush1.bf16.msra.mxu0 %v196
      %429 = vmatprep.subr.bf16.mxu0 0
      %430 = vmatpush1.bf16.msra.mxu0 %v197
      %431 = vmatprep.subr.bf16.mxu0 0
      %432 = vmatpush1.bf16.msra.mxu0 0
      %433 = vmatprep.subr.bf16.mxu0 0
      %434 = vmatpush1.bf16.msra.mxu0 0
      %435 = vmatprep.subr.bf16.mxu0 0
      %436 = vmatpush1.bf16.msra.mxu0 0
      %437 = vmatprep.subr.bf16.mxu0 0
      %438 = vmatpush1.bf16.msra.mxu0 0
      %439 = vmatprep.subr.bf16.mxu0 0
      %440 = vmatpush1.bf16.msra.mxu0 0
      %441 = vmatprep.subr.bf16.mxu0 0
      %442 = vmatpush1.bf16.msra.mxu0 0
      %443 = vmatprep.subr.bf16.mxu0 0
      %444 = vmatpush1.bf16.msra.mxu0 0
      %445 = vmatprep.subr.bf16.mxu0 0
      %446 = vmatpush1.bf16.msra.mxu0 0
      %447 = vmatprep.subr.bf16.mxu0 0
      %448 = vmatpush1.bf16.msra.mxu0 0
      %449 = vmatprep.subr.bf16.mxu0 0
      %450 = vmatpush1.bf16.msra.mxu0 0
      %451 = vmatprep.subr.bf16.mxu0 0
      %452 = vmatpush1.bf16.msra.mxu0 0
      %453 = vmatprep.subr.bf16.mxu0 0
      %454 = vmatpush1.bf16.msra.mxu0 0
      %455 = vmatprep.subr.bf16.mxu0 0
      %456 = vmatpush1.bf16.msra.mxu0 0
      %457 = vmatprep.subr.bf16.mxu0 0
      %458 = vmatpush1.bf16.msra.mxu0 0
      %459 = vmatprep.mubr.bf16.mxu0 0
      %460 = vmatmul.mubr.bf16.gmra.mrb[0].mxu0 %v425
      %v461 = vpop.f32.mrb[0].mxu0
      %v462 = vadd.f32 0.0, %v461
      %v463 = vpop.f32.mrb[0].mxu0
      %v464 = vpop.f32.mrb[0].mxu0
      %v465 = vpop.f32.mrb[0].mxu0
      %466 = vdwg.mxu0
      %v467 = vadd.f32 %v419, %v462
      %v468 = vmul.f32 %v467, 0.5
      %v469 = vsel %vm183, %v467, %v468
      %v470 = vtanh.pop %v469
      %v471 = vadd.f32 %v470, 1.0
      %v472 = vmul.f32 %v471, 0.5
      %v473 = vsel %vm183, %v470, %v472
      %v474 = vmul.f32 %v473, %v411
      %476 = vrot.lane.b32.xlu0 %v473, 64
      %v477 = vpop.permute.xlu0 %476
      %v479 = vmul.f32 %v473, %v477
      %481 = vrot.lane.b32.xlu0 %v479, 32
      %v482 = vpop.permute.xlu0 %481
      %v484 = vadd.f32 %v474, %v482
      %v485 = vtanh.pop %v484
      %487 = vrot.lane.b32.xlu0 %v485, 64
      %v488 = vpop.permute.xlu0 %487
      %v490 = vmul.f32 %v473, %v488
      %s491 = scalar_lea.vmem %s161, 32
      %v492 = vld [vmem:[%s491] sm:$0xff]
      %v493 = vpack.c.bf16 %v490, %v490
      %495 = vrot.lane.b32.xlu0 %v493, 32
      %v496 = vpop.permute.xlu0 %495
      %v498 = vsel %vm200, %v496, 0
      %500 = vmatprep.subr.bf16.mxu0 0
      %501 = vmatpush1.bf16.msra.mxu0 %v196
      %502 = vmatprep.subr.bf16.mxu0 0
      %503 = vmatpush1.bf16.msra.mxu0 %v197
      %504 = vmatprep.subr.bf16.mxu0 0
      %505 = vmatpush1.bf16.msra.mxu0 0
      %506 = vmatprep.subr.bf16.mxu0 0
      %507 = vmatpush1.bf16.msra.mxu0 0
      %508 = vmatprep.subr.bf16.mxu0 0
      %509 = vmatpush1.bf16.msra.mxu0 0
      %510 = vmatprep.subr.bf16.mxu0 0
      %511 = vmatpush1.bf16.msra.mxu0 0
      %512 = vmatprep.subr.bf16.mxu0 0
      %513 = vmatpush1.bf16.msra.mxu0 0
      %514 = vmatprep.subr.bf16.mxu0 0
      %515 = vmatpush1.bf16.msra.mxu0 0
      %516 = vmatprep.subr.bf16.mxu0 0
      %517 = vmatpush1.bf16.msra.mxu0 0
      %518 = vmatprep.subr.bf16.mxu0 0
      %519 = vmatpush1.bf16.msra.mxu0 0
      %520 = vmatprep.subr.bf16.mxu0 0
      %521 = vmatpush1.bf16.msra.mxu0 0
      %522 = vmatprep.subr.bf16.mxu0 0
      %523 = vmatpush1.bf16.msra.mxu0 0
      %524 = vmatprep.subr.bf16.mxu0 0
      %525 = vmatpush1.bf16.msra.mxu0 0
      %526 = vmatprep.subr.bf16.mxu0 0
      %527 = vmatpush1.bf16.msra.mxu0 0
      %528 = vmatprep.subr.bf16.mxu0 0
      %529 = vmatpush1.bf16.msra.mxu0 0
      %530 = vmatprep.subr.bf16.mxu0 0
      %531 = vmatpush1.bf16.msra.mxu0 0
      %532 = vmatprep.mubr.bf16.mxu0 0
      %533 = vmatmul.mubr.bf16.gmra.mrb[0].mxu0 %v498
      %v534 = vpop.f32.mrb[0].mxu0
      %v535 = vadd.f32 0.0, %v534
      %v536 = vpop.f32.mrb[0].mxu0
      %v537 = vpop.f32.mrb[0].mxu0
      %v538 = vpop.f32.mrb[0].mxu0
      %539 = vdwg.mxu0
      %v540 = vadd.f32 %v492, %v535
      %v541 = vmul.f32 %v540, 0.5
      %v542 = vsel %vm183, %v540, %v541
      %v543 = vtanh.pop %v542
      %v544 = vadd.f32 %v543, 1.0
      %v545 = vmul.f32 %v544, 0.5
      %v546 = vsel %vm183, %v543, %v545
      %v547 = vmul.f32 %v546, %v484
      %549 = vrot.lane.b32.xlu0 %v546, 64
      %v550 = vpop.permute.xlu0 %549
      %v552 = vmul.f32 %v546, %v550
      %554 = vrot.lane.b32.xlu0 %v552, 32
      %v555 = vpop.permute.xlu0 %554
      %v557 = vadd.f32 %v547, %v555
      %v558 = vtanh.pop %v557
      %560 = vrot.lane.b32.xlu0 %v558, 64
      %v561 = vpop.permute.xlu0 %560
      %v563 = vmul.f32 %v546, %v561
      %s564 = scalar_lea.vmem %s161, 40
      %v565 = vld [vmem:[%s564] sm:$0xff]
      %v566 = vpack.c.bf16 %v563, %v563
      %568 = vrot.lane.b32.xlu0 %v566, 32
      %v569 = vpop.permute.xlu0 %568
      %v571 = vsel %vm200, %v569, 0
      %573 = vmatprep.subr.bf16.mxu0 0
      %574 = vmatpush1.bf16.msra.mxu0 %v196
      %575 = vmatprep.subr.bf16.mxu0 0
      %576 = vmatpush1.bf16.msra.mxu0 %v197
      %577 = vmatprep.subr.bf16.mxu0 0
      %578 = vmatpush1.bf16.msra.mxu0 0
      %579 = vmatprep.subr.bf16.mxu0 0
      %580 = vmatpush1.bf16.msra.mxu0 0
      %581 = vmatprep.subr.bf16.mxu0 0
      %582 = vmatpush1.bf16.msra.mxu0 0
      %583 = vmatprep.subr.bf16.mxu0 0
      %584 = vmatpush1.bf16.msra.mxu0 0
      %585 = vmatprep.subr.bf16.mxu0 0
      %586 = vmatpush1.bf16.msra.mxu0 0
      %587 = vmatprep.subr.bf16.mxu0 0
      %588 = vmatpush1.bf16.msra.mxu0 0
      %589 = vmatprep.subr.bf16.mxu0 0
      %590 = vmatpush1.bf16.msra.mxu0 0
      %591 = vmatprep.subr.bf16.mxu0 0
      %592 = vmatpush1.bf16.msra.mxu0 0
      %593 = vmatprep.subr.bf16.mxu0 0
      %594 = vmatpush1.bf16.msra.mxu0 0
      %595 = vmatprep.subr.bf16.mxu0 0
      %596 = vmatpush1.bf16.msra.mxu0 0
      %597 = vmatprep.subr.bf16.mxu0 0
      %598 = vmatpush1.bf16.msra.mxu0 0
      %599 = vmatprep.subr.bf16.mxu0 0
      %600 = vmatpush1.bf16.msra.mxu0 0
      %601 = vmatprep.subr.bf16.mxu0 0
      %602 = vmatpush1.bf16.msra.mxu0 0
      %603 = vmatprep.subr.bf16.mxu0 0
      %604 = vmatpush1.bf16.msra.mxu0 0
      %605 = vmatprep.mubr.bf16.mxu0 0
      %606 = vmatmul.mubr.bf16.gmra.mrb[0].mxu0 %v571
      %v607 = vpop.f32.mrb[0].mxu0
      %v608 = vadd.f32 0.0, %v607
      %v609 = vpop.f32.mrb[0].mxu0
      %v610 = vpop.f32.mrb[0].mxu0
      %v611 = vpop.f32.mrb[0].mxu0
      %612 = vdwg.mxu0
      %v613 = vadd.f32 %v565, %v608
      %v614 = vmul.f32 %v613, 0.5
      %v615 = vsel %vm183, %v613, %v614
      %v616 = vtanh.pop %v615
      %v617 = vadd.f32 %v616, 1.0
      %v618 = vmul.f32 %v617, 0.5
      %v619 = vsel %vm183, %v616, %v618
      %v620 = vmul.f32 %v619, %v557
      %622 = vrot.lane.b32.xlu0 %v619, 64
      %v623 = vpop.permute.xlu0 %622
      %v625 = vmul.f32 %v619, %v623
      %627 = vrot.lane.b32.xlu0 %v625, 32
      %v628 = vpop.permute.xlu0 %627
      %v630 = vadd.f32 %v620, %v628
      %v631 = vtanh.pop %v630
      %633 = vrot.lane.b32.xlu0 %v631, 64
      %v634 = vpop.permute.xlu0 %633
      %v636 = vmul.f32 %v619, %v634
      %s637 = scalar_lea.vmem %s161, 48
      %v638 = vld [vmem:[%s637] sm:$0xff]
      %v639 = vpack.c.bf16 %v636, %v636
      %641 = vrot.lane.b32.xlu0 %v639, 32
      %v642 = vpop.permute.xlu0 %641
      %v644 = vsel %vm200, %v642, 0
      %646 = vmatprep.subr.bf16.mxu0 0
      %647 = vmatpush1.bf16.msra.mxu0 %v196
      %648 = vmatprep.subr.bf16.mxu0 0
      %649 = vmatpush1.bf16.msra.mxu0 %v197
      %650 = vmatprep.subr.bf16.mxu0 0
      %651 = vmatpush1.bf16.msra.mxu0 0
      %652 = vmatprep.subr.bf16.mxu0 0
      %653 = vmatpush1.bf16.msra.mxu0 0
      %654 = vmatprep.subr.bf16.mxu0 0
      %655 = vmatpush1.bf16.msra.mxu0 0
      %656 = vmatprep.subr.bf16.mxu0 0
      %657 = vmatpush1.bf16.msra.mxu0 0
      %658 = vmatprep.subr.bf16.mxu0 0
      %659 = vmatpush1.bf16.msra.mxu0 0
      %660 = vmatprep.subr.bf16.mxu0 0
      %661 = vmatpush1.bf16.msra.mxu0 0
      %662 = vmatprep.subr.bf16.mxu0 0
      %663 = vmatpush1.bf16.msra.mxu0 0
      %664 = vmatprep.subr.bf16.mxu0 0
      %665 = vmatpush1.bf16.msra.mxu0 0
      %666 = vmatprep.subr.bf16.mxu0 0
      %667 = vmatpush1.bf16.msra.mxu0 0
      %668 = vmatprep.subr.bf16.mxu0 0
      %669 = vmatpush1.bf16.msra.mxu0 0
      %670 = vmatprep.subr.bf16.mxu0 0
      %671 = vmatpush1.bf16.msra.mxu0 0
      %672 = vmatprep.subr.bf16.mxu0 0
      %673 = vmatpush1.bf16.msra.mxu0 0
      %674 = vmatprep.subr.bf16.mxu0 0
      %675 = vmatpush1.bf16.msra.mxu0 0
      %676 = vmatprep.subr.bf16.mxu0 0
      %677 = vmatpush1.bf16.msra.mxu0 0
      %678 = vmatprep.mubr.bf16.mxu0 0
      %679 = vmatmul.mubr.bf16.gmra.mrb[0].mxu0 %v644
      %v680 = vpop.f32.mrb[0].mxu0
      %v681 = vadd.f32 0.0, %v680
      %v682 = vpop.f32.mrb[0].mxu0
      %v683 = vpop.f32.mrb[0].mxu0
      %v684 = vpop.f32.mrb[0].mxu0
      %685 = vdwg.mxu0
      %v686 = vadd.f32 %v638, %v681
      %v687 = vmul.f32 %v686, 0.5
      %v688 = vsel %vm183, %v686, %v687
      %v689 = vtanh.pop %v688
      %v690 = vadd.f32 %v689, 1.0
      %v691 = vmul.f32 %v690, 0.5
      %v692 = vsel %vm183, %v689, %v691
      %v693 = vmul.f32 %v692, %v630
      %695 = vrot.lane.b32.xlu0 %v692, 64
      %v696 = vpop.permute.xlu0 %695
      %v698 = vmul.f32 %v692, %v696
      %700 = vrot.lane.b32.xlu0 %v698, 32
      %v701 = vpop.permute.xlu0 %700
      %v703 = vadd.f32 %v693, %v701
      %v704 = vtanh.pop %v703
      %706 = vrot.lane.b32.xlu0 %v704, 64
      %v707 = vpop.permute.xlu0 %706
      %v709 = vmul.f32 %v692, %v707
      %s710 = scalar_lea.vmem %s161, 56
      %v711 = vld [vmem:[%s710] sm:$0xff]
      %v712 = vpack.c.bf16 %v709, %v709
      %714 = vrot.lane.b32.xlu0 %v712, 32
      %v715 = vpop.permute.xlu0 %714
      %v717 = vsel %vm200, %v715, 0
      %719 = vmatprep.subr.bf16.mxu0 0
      %720 = vmatpush1.bf16.msra.mxu0 %v196
      %721 = vmatprep.subr.bf16.mxu0 0
      %722 = vmatpush1.bf16.msra.mxu0 %v197
      %723 = vmatprep.subr.bf16.mxu0 0
      %724 = vmatpush1.bf16.msra.mxu0 0
      %725 = vmatprep.subr.bf16.mxu0 0
      %726 = vmatpush1.bf16.msra.mxu0 0
      %727 = vmatprep.subr.bf16.mxu0 0
      %728 = vmatpush1.bf16.msra.mxu0 0
      %729 = vmatprep.subr.bf16.mxu0 0
      %730 = vmatpush1.bf16.msra.mxu0 0
      %731 = vmatprep.subr.bf16.mxu0 0
      %732 = vmatpush1.bf16.msra.mxu0 0
      %733 = vmatprep.subr.bf16.mxu0 0
      %734 = vmatpush1.bf16.msra.mxu0 0
      %735 = vmatprep.subr.bf16.mxu0 0
      %736 = vmatpush1.bf16.msra.mxu0 0
      %737 = vmatprep.subr.bf16.mxu0 0
      %738 = vmatpush1.bf16.msra.mxu0 0
      %739 = vmatprep.subr.bf16.mxu0 0
      %740 = vmatpush1.bf16.msra.mxu0 0
      %741 = vmatprep.subr.bf16.mxu0 0
      %742 = vmatpush1.bf16.msra.mxu0 0
      %743 = vmatprep.subr.bf16.mxu0 0
      %744 = vmatpush1.bf16.msra.mxu0 0
      %745 = vmatprep.subr.bf16.mxu0 0
      %746 = vmatpush1.bf16.msra.mxu0 0
      %747 = vmatprep.subr.bf16.mxu0 0
      %748 = vmatpush1.bf16.msra.mxu0 0
      %749 = vmatprep.subr.bf16.mxu0 0
      %750 = vmatpush1.bf16.msra.mxu0 0
      %751 = vmatprep.mubr.bf16.mxu0 0
      %752 = vmatmul.mubr.bf16.gmra.mrb[0].mxu0 %v717
      %v753 = vpop.f32.mrb[0].mxu0
      %v754 = vadd.f32 0.0, %v753
      %v755 = vpop.f32.mrb[0].mxu0
      %v756 = vpop.f32.mrb[0].mxu0
      %v757 = vpop.f32.mrb[0].mxu0
      %758 = vdwg.mxu0
      %v759 = vadd.f32 %v711, %v754
      %v760 = vmul.f32 %v759, 0.5
      %v761 = vsel %vm183, %v759, %v760
      %v762 = vtanh.pop %v761
      %v763 = vadd.f32 %v762, 1.0
      %v764 = vmul.f32 %v763, 0.5
      %v765 = vsel %vm183, %v762, %v764
      %v766 = vmul.f32 %v765, %v703
      %768 = vrot.lane.b32.xlu0 %v765, 64
      %v769 = vpop.permute.xlu0 %768
      %v771 = vmul.f32 %v765, %v769
      %773 = vrot.lane.b32.xlu0 %v771, 32
      %v774 = vpop.permute.xlu0 %773
      %v776 = vadd.f32 %v766, %v774
      %v777 = vtanh.pop %v776
      %779 = vrot.lane.b32.xlu0 %v777, 64
      %v780 = vpop.permute.xlu0 %779
      %v782 = vmul.f32 %v765, %v780
      %784 = vrot.lane.b32.xlu0 %v782, 32
      %v785 = vpop.permute.xlu0 %784
      %787 = vst.msk [vmem:[%s166] sm:$0xff] %vm200, %v785
      %789 = vrot.lane.b32.xlu0 %v776, 96
      %v790 = vpop.permute.xlu0 %789
      %792 = vst.msk [vmem:[#allocation2] sm:$0xff] %vm200, %v790
      %p793 = scmp.lt.s32.totalorder %s17, 0
      %s794 = scalar_select %p793, %s17, 0
      %s795 = smul.addr %s794, 8
      %s796 = scalar_lea.vmem %s2, %s795
      // Predicated region
      $region33: #{rnn_lstm_forward.1} parent=27 // pred_check
        %p797 = pneg %p92
      $region34: #{rnn_lstm_forward.1} parent=27 // pred_check_branch
        %799 = sbr.rel (%p797) target = $region36
      $region35: #{rnn_lstm_forward.1} parent=27 // pred_region
        _
      $region36: #{rnn_lstm_forward.1} parent=27 // pred_fallthru
        _
      // Predicated region
      $region37: #{rnn_lstm_forward.1} parent=27 // pred_check
        %p800 = pneg %p92
      $region38: #{rnn_lstm_forward.1} parent=27 // pred_check_branch
        %802 = sbr.rel (%p800) target = $region40
      $region39: #{rnn_lstm_forward.1} parent=27 // pred_region
        %p803 = scmp.lt.s32.totalorder %s17, 0
        %s804 = scalar_select %p803, %s17, 0
        %s805 = smul.addr %s804, 8
        %s806 = scalar_lea.vmem %s2, %s805
      $region40: #{rnn_lstm_forward.1} parent=27 // pred_fallthru
        _
    $region28: #{rnn_lstm_forward.1} parent=5 // pred_fallthru
      _
    %p807 = scmp.le.s32.totalorder 2, %s8
    // Predicated region
    $region41: #{rnn_lstm_forward.1} parent=5 // pred_check
      %p808 = pneg %p807
    $region42: #{rnn_lstm_forward.1} parent=5 // pred_check_branch
      %810 = sbr.rel (%p808) target = $region44
    $region43: #{rnn_lstm_forward.1} parent=5 // pred_region
      %s811 = ssub.s32 %s8, 2
    $region44: #{rnn_lstm_forward.1} parent=5 // pred_fallthru
      _
  $region6: #{rnn_lstm_forward.1} parent=0 // loop_footer
    %s12 = sadd.s32 1, %s8
  $region7: #{rnn_lstm_forward.1} parent=0 // loop_footer_branch
    %7 = sbr.rel target = $region3
  $region8: #{rnn_lstm_forward.1} parent=0 // loop_exit
    _

</llo_original>
